<compile_context>
chip_gen: v7x
topology: tpu7x:2x2x1
jax: 0.10.0
libtpu: 0.0.40
codegen_flags: <defaults>
</compile_context>

<pallas_src>
import functools
import numpy as np
import jax
import jax.numpy as jnp
from jax import lax
from jax.experimental import pallas as pl
from jax.experimental.pallas import tpu as pltpu

GAMMA = 1.5   # FocalLoss defaults in ultralytics
ALPHA = 0.25
EPS = 1e-7
PAD_LOGIT = -30.0   # sigmoid(-30) underflows vs 1.0 in f32 -> exactly 0 bg loss


# ----------------------------- Pallas kernel ------------------------------- #

def _detr_layer_kernel(scores_ref, pos_ref, pbox_ref, gbox_ref, out_ref,
                       acc_ref, *, n_matched):
    """Grid = (2, L, half_tiles).

    Hot loop (every grid step): label-independent background focal loss on a
    lane-dense (tile_m, 128) block, reduced to a single (8, 128) vreg that is
    accumulated in VMEM scratch.

    Finalize (last row tile of each (c, l)): reduce the accumulator, apply the
    per-matched-positive focal correction, compute matched-box L1 / GIoU sums
    (only in the c == 0 half) and write a lane-dense (8, 128) output block.
    """
    c = pl.program_id(0)
    r = pl.program_id(2)
    n_r = pl.num_programs(2)

    @pl.when(r == 0)
    def _init():
        acc_ref[...] = jnp.zeros_like(acc_ref)

    # ---- background focal loss on this lane-dense tile -------------------- #
    x = scores_ref[0].astype(jnp.float32)                     # (tile_m, 128)
    p = jax.nn.sigmoid(x)
    # BCE-with-logits at label = 0:  max(x, 0) - log(max(p, 1-p))
    bce0 = jnp.maximum(x, 0.0) - jnp.log(jnp.maximum(p, 1.0 - p))
    # (1 - p_t)^1.5 with p_t = 1 - p  ->  p^1.5 ;  alpha factor = 1 - ALPHA
    loss_bg = bce0 * (p * jnp.sqrt(p)) * (1.0 - ALPHA)
    # reduce to one vreg (pure VALU adds; reshape is a layout no-op)
    acc_ref[...] += jnp.sum(loss_bg.reshape(-1, 8, 128), axis=0)

    # ---- finalize this (c, l) slice ---------------------------------------- #
    @pl.when(r == n_r - 1)
    def _finalize():
        focal_bg = jnp.sum(acc_ref[...])
        is_c0 = (c == 0).astype(jnp.float32)   # box/correction only in half 0

        # per-matched-positive correction: replace label=0 loss by label=1 loss
        xp = pos_ref[0].astype(jnp.float32)                   # (1, n_pad)
        pp = jax.nn.sigmoid(xp)
        logterm = jnp.log(jnp.maximum(pp, 1.0 - pp))
        b0 = jnp.maximum(xp, 0.0) - logterm                   # label = 0 BCE
        b1 = b0 - xp                                          # label = 1 BCE
        one_m = 1.0 - pp
        pos_loss = b1 * (one_m * jnp.sqrt(one_m)) * ALPHA
        bg_loss = b0 * (pp * jnp.sqrt(pp)) * (1.0 - ALPHA)
        lane1 = lax.broadcasted_iota(jnp.int32, xp.shape, 1)
        valid1 = (lane1 < n_matched).astype(jnp.float32)
        corr = jnp.sum((pos_loss - bg_loss) * valid1)

        focal_sum = focal_bg + corr * is_c0

        # matched-box L1 + GIoU sums (coordinate-major, lane-dense)
        pb = pbox_ref[0].astype(jnp.float32)                  # (4, n_pad) xywh
        gb = gbox_ref[...].astype(jnp.float32)                # (4, n_pad) xywh
        lane4 = lax.broadcasted_iota(jnp.int32, pb.shape, 1)
        valid4 = (lane4 < n_matched).astype(jnp.float32)
        l1_sum = jnp.sum(jnp.abs(pb - gb) * valid4) * is_c0

        px, py, pw, ph = pb[0:1], pb[1:2], pb[2:3], pb[3:4]   # (1, n_pad) rows
        gx, gy, gw, gh = gb[0:1], gb[1:2], gb[2:3], gb[3:4]
        b1x1, b1x2 = px - pw * 0.5, px + pw * 0.5
        b1y1, b1y2 = py - ph * 0.5, py + ph * 0.5
        b2x1, b2x2 = gx - gw * 0.5, gx + gw * 0.5
        b2y1, b2y2 = gy - gh * 0.5, gy + gh * 0.5
        inter = (jnp.maximum(jnp.minimum(b1x2, b2x2) - jnp.maximum(b1x1, b2x1), 0.0)
                 * jnp.maximum(jnp.minimum(b1y2, b2y2) - jnp.maximum(b1y1, b2y1), 0.0))
        union = pw * ph + gw * gh - inter + EPS
        iou = inter / union
        cw = jnp.maximum(b1x2, b2x2) - jnp.minimum(b1x1, b2x1)
        ch = jnp.maximum(b1y2, b2y2) - jnp.minimum(b1y1, b2y1)
        c_area = cw * ch + EPS
        giou = iou - (c_area - union) / c_area
        giou_sum = jnp.sum((1.0 - giou) * valid1) * is_c0

        # pack the three scalars into the lane-dense (8, 128) output block
        row8 = lax.broadcasted_iota(jnp.int32, (8, 128), 0)
        col = lax.broadcasted_iota(jnp.int32, (8, 128), 1)
        outv = jnp.zeros((8, 128), jnp.float32)
        outv = jnp.where((row8 == 0) & (col == 0), focal_sum, outv)
        outv = jnp.where((row8 == 0) & (col == 1), l1_sum, outv)
        outv = jnp.where((row8 == 0) & (col == 2), giou_sum, outv)
        out_ref[0, 0] = outv


def _round_up(x, m):
    return (x + m - 1) // m * m


def _cdiv(a, b):
    return (a + b - 1) // b


def detr_loss_sums(pred_scores, pos_logits, pred_matched, gt_matched, *,
                   n_matched, max_tile_m=4096):
    """Fused per-layer (focal_sum, l1_sum, sum(1-giou)) for all decoder layers.

    pred_scores:  [L, rows, NC] logits (rows = batch * queries)
    pos_logits:   [L, N] logits at the matched (query, matched-class) slots
    pred_matched: [L, N, 4] matched predicted boxes (xywh)
    gt_matched:   [N, 4]    matched ground-truth boxes (xywh)
    """
    L, rows, NC = pred_scores.shape
    total = rows * NC

    # lane-dense flattening of the class-score tensor: [L, M, 128]
    m = max(8, _round_up(_cdiv(total, 128), 8))
    tile_m = min(m, max_tile_m)
    n_tiles = _round_up(_cdiv(m, tile_m), 2)     # even -> clean 2-way core split
    m_pad = n_tiles * tile_m
    half_tiles = n_tiles // 2

    flat = pred_scores.reshape(L, total).astype(jnp.float32)
    flat = jnp.pad(flat, ((0, 0), (0, m_pad * 128 - total)),
                   constant_values=PAD_LOGIT)
    scores = flat.reshape(L, m_pad, 128)

    # matched boxes / positive logits, coordinate-major and lane-padded
    N = pred_matched.shape[1]
    n_pad = max(128, _round_up(max(N, 1), 128))
    pm = jnp.transpose(pred_matched, (0, 2, 1)).astype(jnp.float32)   # [L, 4, N]
    gm = jnp.transpose(gt_matched, (1, 0)).astype(jnp.float32)        # [4, N]
    pm = jnp.pad(pm, ((0, 0), (0, 0), (0, n_pad - N)))
    gm = jnp.pad(gm, ((0, 0), (0, n_pad - N)))
    pos = jnp.pad(pos_logits.reshape(L, 1, N).astype(jnp.float32),
                  ((0, 0), (0, 0), (0, n_pad - N)))

    kernel = functools.partial(_detr_layer_kernel, n_matched=int(n_matched))
    sums = pl.pallas_call(
        kernel,
        out_shape=jax.ShapeDtypeStruct((2, L, 8, 128), jnp.float32),
        grid_spec=pltpu.PrefetchScalarGridSpec(
            num_scalar_prefetch=0,
            grid=(2, L, half_tiles),
            in_specs=[
                pl.BlockSpec((1, tile_m, 128),
                             lambda c, l, r: (l, c * half_tiles + r, 0)),
                pl.BlockSpec((1, 1, n_pad), lambda c, l, r: (l, 0, 0)),
                pl.BlockSpec((1, 4, n_pad), lambda c, l, r: (l, 0, 0)),
                pl.BlockSpec((4, n_pad), lambda c, l, r: (0, 0)),
            ],
            out_specs=pl.BlockSpec((1, 1, 8, 128), lambda c, l, r: (c, l, 0, 0)),
            scratch_shapes=[pltpu.VMEM((8, 128), jnp.float32)],
        ),
        compiler_params=pltpu.CompilerParams(
            dimension_semantics=("parallel", "parallel", "arbitrary")),
    )(scores, pos, pm, gm)

    both = sums[0] + sums[1]          # combine the two core-halves' partials
    return both[:, 0, 0], both[:, 0, 1], both[:, 0, 2]


# ------------------------------- DETR loss --------------------------------- #

def detr_loss(pred_bboxes, pred_scores, gt_cls, gt_bboxes,
              batch_idx, src_idx, dst_idx, nc, num_gts, loss_gain,
              aux_loss=True):
    """
    pred_bboxes: [L, B, Q, 4]   pred_scores: [L, B, Q, NC]
    gt_cls: [num_gts] int32     gt_bboxes: [num_gts, 4]
    batch_idx/src_idx/dst_idx: flattened match indices (dst is global).
    num_gts / index lengths must be static (Python ints / fixed-size arrays).
    """
    L, B, Q, NC = pred_scores.shape
    assert NC == nc
    rows = B * Q
    N = int(dst_idx.shape[0])

    matched_cls = gt_cls[dst_idx].astype(jnp.int32)                # [N]
    # single XLA gathers shared by ALL decoder layers
    pos_logits = pred_scores[:, batch_idx, src_idx, matched_cls]   # [L, N]
    pred_matched = pred_bboxes[:, batch_idx, src_idx, :]           # [L, N, 4]
    gt_matched = gt_bboxes[dst_idx]                                # [N, 4]

    focal, l1, giou = detr_loss_sums(
        pred_scores.reshape(L, rows, NC), pos_logits,
        pred_matched, gt_matched, n_matched=N)

    cls_denom = float(max(int(num_gts), 1))
    box_denom = float(max(N, 1))
    # fl(...) = sum/nq ; then "/= max(num_gts,1)/nq" -> total / max(num_gts, 1)
    loss_class = focal * (loss_gain['class'] / cls_denom)
    loss_bbox = l1 * (loss_gain['bbox'] / box_denom)
    loss_giou = giou * (loss_gain['giou'] / box_denom)

    losses = {'loss_class': loss_class[-1],
              'loss_bbox': loss_bbox[-1],
              'loss_giou': loss_giou[-1]}
    if aux_loss:
        losses['loss_class_aux'] = jnp.sum(loss_class[:-1])
        losses['loss_bbox_aux'] = jnp.sum(loss_bbox[:-1])
        losses['loss_giou_aux'] = jnp.sum(loss_giou[:-1])
    return losses


# ----------------------------- numpy reference ------------------------------ #

def _numpy_reference(pred_bboxes, pred_scores, gt_cls, gt_bboxes,
                     batch_idx, src_idx, dst_idx, nc, num_gts, loss_gain):
    pb = np.asarray(pred_bboxes, dtype=np.float64)
    ps = np.asarray(pred_scores, dtype=np.float64)
    gc = np.asarray(gt_cls)
    gb = np.asarray(gt_bboxes, dtype=np.float64)
    bi, si, di = np.asarray(batch_idx), np.asarray(src_idx), np.asarray(dst_idx)
    L, B, Q, NC = ps.shape
    targets = np.full((B, Q), nc, dtype=np.int64)
    targets[bi, si] = gc[di]
    label = (targets[..., None] == np.arange(nc)[None, None, :]).astype(np.float64)
    gm = gb[di]
    cls_denom = max(int(num_gts), 1)
    box_denom = max(len(di), 1)

    def focal_sum(x, z):
        bce = np.maximum(x, 0) - x * z + np.log1p(np.exp(-np.abs(x)))
        p = 1.0 / (1.0 + np.exp(-x))
        p_t = z * p + (1 - z) * (1 - p)
        return float((bce * (1.0 - p_t) ** GAMMA
                      * (z * ALPHA + (1 - z) * (1 - ALPHA))).sum())

    def giou_sum(p, g):
        px, py, pw, ph = p[:, 0], p[:, 1], p[:, 2], p[:, 3]
        gx, gy, gw, gh = g[:, 0], g[:, 1], g[:, 2], g[:, 3]
        b1x1, b1x2, b1y1, b1y2 = px - pw / 2, px + pw / 2, py - ph / 2, py + ph / 2
        b2x1, b2x2, b2y1, b2y2 = gx - gw / 2, gx + gw / 2, gy - gh / 2, gy + gh / 2
        inter = (np.clip(np.minimum(b1x2, b2x2) - np.maximum(b1x1, b2x1), 0, None)
                 * np.clip(np.minimum(b1y2, b2y2) - np.maximum(b1y1, b2y1), 0, None))
        union = pw * ph + gw * gh - inter + EPS
        iou = inter / union
        cw = np.maximum(b1x2, b2x2) - np.minimum(b1x1, b2x1)
        ch = np.maximum(b1y2, b2y2) - np.minimum(b1y1, b2y1)
        c_area = cw * ch + EPS
        return float((1.0 - (iou - (c_area - union) / c_area)).sum())

    per_layer = []
    for l in range(L):
        lc = focal_sum(ps[l].reshape(-1, nc), label.reshape(-1, nc)) / cls_denom * loss_gain['class']
        if num_gts:
            pmat = pb[l, bi, si]
            lb = loss_gain['bbox'] * np.abs(pmat - gm).sum() / box_denom
            lg = loss_gain['giou'] * giou_sum(pmat, gm) / box_denom
        else:
            lb = lg = 0.0
        per_layer.append((lc, lb, lg))
    return {'loss_class': per_layer[-1][0], 'loss_bbox': per_layer[-1][1],
            'loss_giou': per_layer[-1][2],
            'loss_class_aux': sum(p[0] for p in per_layer[:-1]),
            'loss_bbox_aux': sum(p[1] for p in per_layer[:-1]),
            'loss_giou_aux': sum(p[2] for p in per_layer[:-1])}


# --------------------------------- driver ----------------------------------- #

if __name__ == "__main__":
    key = jax.random.PRNGKey(0)
    L, B, Q, NC = 3, 2, 8, 16          # decoder layers, batch, queries, classes
    k1, k2, k3, k4 = jax.random.split(key, 4)

    pred_bboxes = jax.random.uniform(k1, (L, B, Q, 4), dtype=jnp.float32,
                                     minval=0.05, maxval=0.95)
    pred_scores = jax.random.normal(k2, (L, B, Q, NC), dtype=jnp.float32)

    gt_groups = [3, 2]
    num_gts = sum(gt_groups)
    gt_cls = jax.random.randint(k3, (num_gts,), 0, NC, dtype=jnp.int32)
    gt_bboxes = jax.random.uniform(k4, (num_gts, 4), dtype=jnp.float32,
                                   minval=0.1, maxval=0.9)

    # Deterministic match indices per image: (query indices, global gt indices)
    match_indices = [(np.array([0, 2, 5]), np.array([1, 0, 2])),
                     (np.array([1, 4]), np.array([4, 3]))]
    batch_idx = jnp.asarray(
        np.concatenate([np.full_like(s, i) for i, (s, _) in enumerate(match_indices)]),
        dtype=jnp.int32)
    src_idx = jnp.asarray(np.concatenate([s for s, _ in match_indices]), dtype=jnp.int32)
    dst_idx = jnp.asarray(np.concatenate([d for _, d in match_indices]), dtype=jnp.int32)

    loss_gain = {'class': 1.0, 'bbox': 5.0, 'giou': 2.0,
                 'no_object': 0.1, 'mask': 1.0, 'dice': 1.0}

    losses = detr_loss(pred_bboxes, pred_scores, gt_cls, gt_bboxes,
                       batch_idx, src_idx, dst_idx,
                       nc=NC, num_gts=num_gts, loss_gain=loss_gain, aux_loss=True)
    losses = {k: jax.block_until_ready(v) for k, v in losses.items()}

    ref = _numpy_reference(pred_bboxes, pred_scores, gt_cls, gt_bboxes,
                           batch_idx, src_idx, dst_idx,
                           nc=NC, num_gts=num_gts, loss_gain=loss_gain)
    for k, v in losses.items():
        assert np.isfinite(float(v)), f"non-finite loss {k}"
        np.testing.assert_allclose(float(v), ref[k], rtol=2e-3, atol=1e-4,
                                   err_msg=f"mismatch in {k}")
    print("KERNEL_OK")
</pallas_src>

<mosaic_0001>
module attributes {stable_mosaic.version = 11 : i64} {
  func.func @_detr_layer_kernel(%arg0: i32, %arg1: i32, %arg2: i32, %arg3: memref<1x8x128xf32, #tpu.memory_space<vmem>>, %arg4: memref<1x1x128xf32, #tpu.memory_space<vmem>>, %arg5: memref<1x4x128xf32, #tpu.memory_space<vmem>>, %arg6: memref<4x128xf32, #tpu.memory_space<vmem>>, %arg7: memref<1x1x8x128xf32, #tpu.memory_space<vmem>>, %arg8: memref<8x128xf32, #tpu.memory_space<vmem>>) attributes {dimension_semantics = [#tpu.dimension_semantics<parallel>, #tpu.dimension_semantics<parallel>, #tpu.dimension_semantics<arbitrary>], iteration_bounds = array<i64: 2, 3, 1>, scalar_prefetch = 0 : i64, scratch_operands = 1 : i64, tpu.core_type = #tpu.core_type<tc>, window_params = [{transform_indices = @transform_0, window_bounds = array<i64: 1, 8, 128>}, {transform_indices = @transform_1, window_bounds = array<i64: 1, 1, 128>}, {transform_indices = @transform_2, window_bounds = array<i64: 1, 4, 128>}, {pipeline_mode = #tpu.pipeline_mode<synchronous>, transform_indices = @transform_3, window_bounds = array<i64: 4, 128>}, {transform_indices = @transform_4, window_bounds = array<i64: 1, 1, 8, 128>}]} {
    %c0_i32 = arith.constant 0 : i32
    %0 = arith.cmpi eq, %arg2, %c0_i32 : i32
    %1 = arith.extui %0 : i1 to i32
    %c0_i32_0 = arith.constant 0 : i32
    %2 = arith.cmpi ne, %1, %c0_i32_0 : i32
    scf.if %2 {
      %cst_13 = arith.constant 0.000000e+00 : f32
      %30 = vector.broadcast %cst_13 : f32 to vector<8x128xf32>
      %c0_14 = arith.constant 0 : index
      %c0_15 = arith.constant 0 : index
      %31 = vector.load %arg8[%c0_14, %c0_15] : memref<8x128xf32, #tpu.memory_space<vmem>>, vector<8x128xf32>
      tpu.vector_store %arg8[%c0_14, %c0_15], %30 {strides = array<i32>} : memref<8x128xf32, #tpu.memory_space<vmem>>, vector<8x128xf32>,
    } else {
    }
    %c0 = arith.constant 0 : index
    %c0_1 = arith.constant 0 : index
    %c0_2 = arith.constant 0 : index
    %3 = vector.load %arg3[%c0, %c0_1, %c0_2] : memref<1x8x128xf32, #tpu.memory_space<vmem>>, vector<1x8x128xf32>
    %4 = vector.shape_cast %3 : vector<1x8x128xf32> to vector<8x128xf32>
    %5 = arith.negf %4 : vector<8x128xf32>
    %6 = math.exp %5 : vector<8x128xf32>
    %cst = arith.constant 1.000000e+00 : f32
    %7 = vector.broadcast %cst : f32 to vector<8x128xf32>
    %8 = arith.addf %7, %6 : vector<8x128xf32>
    %9 = arith.divf %7, %8 : vector<8x128xf32>
    %cst_3 = arith.constant 0.000000e+00 : f32
    %10 = vector.broadcast %cst_3 : f32 to vector<8x128xf32>
    %11 = arith.maximumf %4, %10 : vector<8x128xf32>
    %cst_4 = arith.constant 1.000000e+00 : f32
    %12 = vector.broadcast %cst_4 : f32 to vector<8x128xf32>
    %13 = arith.subf %12, %9 : vector<8x128xf32>
    %14 = arith.maximumf %9, %13 : vector<8x128xf32>
    %15 = math.log %14 : vector<8x128xf32>
    %16 = arith.subf %11, %15 : vector<8x128xf32>
    %17 = math.sqrt %9 : vector<8x128xf32>
    %18 = arith.mulf %9, %17 : vector<8x128xf32>
    %19 = arith.mulf %16, %18 : vector<8x128xf32>
    %cst_5 = arith.constant 7.500000e-01 : f32
    %20 = vector.broadcast %cst_5 : f32 to vector<8x128xf32>
    %21 = arith.mulf %19, %20 : vector<8x128xf32>
    %c0_6 = arith.constant 0 : index
    %c0_7 = arith.constant 0 : index
    %22 = vector.load %arg8[%c0_6, %c0_7] : memref<8x128xf32, #tpu.memory_space<vmem>>, vector<8x128xf32>
    %23 = vector.shape_cast %21 : vector<8x128xf32> to vector<1x8x128xf32>
    %cst_8 = arith.constant dense<0.000000e+00> : vector<8x128xf32>
    %24 = vector.multi_reduction <add>, %23, %cst_8 [0] : vector<1x8x128xf32> to vector<8x128xf32>
    %25 = arith.addf %22, %24 : vector<8x128xf32>
    %c0_9 = arith.constant 0 : index
    %c0_10 = arith.constant 0 : index
    %26 = vector.load %arg8[%c0_9, %c0_10] : memref<8x128xf32, #tpu.memory_space<vmem>>, vector<8x128xf32>
    tpu.vector_store %arg8[%c0_9, %c0_10], %25 {strides = array<i32>} : memref<8x128xf32, #tpu.memory_space<vmem>>, vector<8x128xf32>,
    %c0_i32_11 = arith.constant 0 : i32
    %27 = arith.cmpi eq, %arg2, %c0_i32_11 : i32
    %28 = arith.extui %27 : i1 to i32
    %c0_i32_12 = arith.constant 0 : i32
    %29 = arith.cmpi ne, %28, %c0_i32_12 : i32
    scf.if %29 {
      %c0_13 = arith.constant 0 : index
      %c0_14 = arith.constant 0 : index
      %30 = vector.load %arg8[%c0_13, %c0_14] : memref<8x128xf32, #tpu.memory_space<vmem>>, vector<8x128xf32>
      %31 = vector.shape_cast %30 : vector<8x128xf32> to vector<1x8x128xf32>
      %cst_15 = arith.constant dense<0.000000e+00> : vector<1xf32>
      %32 = vector.multi_reduction <add>, %31, %cst_15 [1, 2] : vector<1x8x128xf32> to vector<1xf32>
      %33 = vector.shape_cast %32 : vector<1xf32> to vector<1x1x1xf32>
      %34 = vector.extract %33[0, 0, 0] : f32 from vector<1x1x1xf32>
      %c0_i32_16 = arith.constant 0 : i32
      %35 = arith.cmpi eq, %arg0, %c0_i32_16 : i32
      %36 = arith.extui %35 : i1 to i32
      %37 = arith.sitofp %36 : i32 to f32
      %c0_17 = arith.constant 0 : index
      %c0_18 = arith.constant 0 : index
      %c0_19 = arith.constant 0 : index
      %38 = vector.load %arg4[%c0_17, %c0_18, %c0_19] : memref<1x1x128xf32, #tpu.memory_space<vmem>>, vector<1x1x128xf32>
      %39 = vector.shape_cast %38 : vector<1x1x128xf32> to vector<1x128xf32>
      %40 = arith.negf %39 : vector<1x128xf32>
      %41 = math.exp %40 : vector<1x128xf32>
      %cst_20 = arith.constant 1.000000e+00 : f32
      %42 = vector.broadcast %cst_20 : f32 to vector<1x128xf32>
      %43 = arith.addf %42, %41 : vector<1x128xf32>
      %44 = arith.divf %42, %43 : vector<1x128xf32>
      %cst_21 = arith.constant 1.000000e+00 : f32
      %45 = vector.broadcast %cst_21 : f32 to vector<1x128xf32>
      %46 = arith.subf %45, %44 : vector<1x128xf32>
      %47 = arith.maximumf %44, %46 : vector<1x128xf32>
      %48 = math.log %47 : vector<1x128xf32>
      %cst_22 = arith.constant 0.000000e+00 : f32
      %49 = vector.broadcast %cst_22 : f32 to vector<1x128xf32>
      %50 = arith.maximumf %39, %49 : vector<1x128xf32>
      %51 = arith.subf %50, %48 : vector<1x128xf32>
      %52 = arith.subf %51, %39 : vector<1x128xf32>
      %cst_23 = arith.constant 1.000000e+00 : f32
      %53 = vector.broadcast %cst_23 : f32 to vector<1x128xf32>
      %54 = arith.subf %53, %44 : vector<1x128xf32>
      %55 = math.sqrt %54 : vector<1x128xf32>
      %56 = arith.mulf %54, %55 : vector<1x128xf32>
      %57 = arith.mulf %52, %56 : vector<1x128xf32>
      %cst_24 = arith.constant 2.500000e-01 : f32
      %58 = vector.broadcast %cst_24 : f32 to vector<1x128xf32>
      %59 = arith.mulf %57, %58 : vector<1x128xf32>
      %60 = math.sqrt %44 : vector<1x128xf32>
      %61 = arith.mulf %44, %60 : vector<1x128xf32>
      %62 = arith.mulf %51, %61 : vector<1x128xf32>
      %cst_25 = arith.constant 7.500000e-01 : f32
      %63 = vector.broadcast %cst_25 : f32 to vector<1x128xf32>
      %64 = arith.mulf %62, %63 : vector<1x128xf32>
      %65 = tpu.iota {dimensions = array<i32: 1>} : vector<1x128xi32>
      %c5_i32 = arith.constant 5 : i32
      %66 = vector.broadcast %c5_i32 : i32 to vector<1x128xi32>
      %67 = arith.cmpi slt, %65, %66 : vector<1x128xi32>
      %68 = arith.extui %67 : vector<1x128xi1> to vector<1x128xi32>
      %69 = arith.sitofp %68 : vector<1x128xi32> to vector<1x128xf32>
      %70 = arith.subf %59, %64 : vector<1x128xf32>
      %71 = arith.mulf %70, %69 : vector<1x128xf32>
      %72 = vector.shape_cast %71 : vector<1x128xf32> to vector<1x1x128xf32>
      %cst_26 = arith.constant dense<0.000000e+00> : vector<1xf32>
      %73 = vector.multi_reduction <add>, %72, %cst_26 [1, 2] : vector<1x1x128xf32> to vector<1xf32>
      %74 = vector.shape_cast %73 : vector<1xf32> to vector<1x1x1xf32>
      %75 = vector.extract %74[0, 0, 0] : f32 from vector<1x1x1xf32>
      %76 = arith.mulf %75, %37 : f32
      %77 = arith.addf %34, %76 : f32
      %c0_27 = arith.constant 0 : index
      %c0_28 = arith.constant 0 : index
      %c0_29 = arith.constant 0 : index
      %78 = vector.load %arg5[%c0_27, %c0_28, %c0_29] : memref<1x4x128xf32, #tpu.memory_space<vmem>>, vector<1x4x128xf32>
      %79 = vector.shape_cast %78 : vector<1x4x128xf32> to vector<4x128xf32>
      %c0_30 = arith.constant 0 : index
      %c0_31 = arith.constant 0 : index
      %80 = vector.load %arg6[%c0_30, %c0_31] : memref<4x128xf32, #tpu.memory_space<vmem>>, vector<4x128xf32>
      %81 = tpu.iota {dimensions = array<i32: 1>} : vector<4x128xi32>
      %c5_i32_32 = arith.constant 5 : i32
      %82 = vector.broadcast %c5_i32_32 : i32 to vector<4x128xi32>
      %83 = arith.cmpi slt, %81, %82 : vector<4x128xi32>
      %84 = arith.extui %83 : vector<4x128xi1> to vector<4x128xi32>
      %85 = arith.sitofp %84 : vector<4x128xi32> to vector<4x128xf32>
      %86 = arith.subf %79, %80 : vector<4x128xf32>
      %87 = math.absf %86 : vector<4x128xf32>
      %88 = arith.mulf %87, %85 : vector<4x128xf32>
      %89 = vector.shape_cast %88 : vector<4x128xf32> to vector<1x4x128xf32>
      %cst_33 = arith.constant dense<0.000000e+00> : vector<1xf32>
      %90 = vector.multi_reduction <add>, %89, %cst_33 [1, 2] : vector<1x4x128xf32> to vector<1xf32>
      %91 = vector.shape_cast %90 : vector<1xf32> to vector<1x1x1xf32>
      %92 = vector.extract %91[0, 0, 0] : f32 from vector<1x1x1xf32>
      %93 = arith.mulf %92, %37 : f32
      %94 = vector.extract_strided_slice %79 {offsets = [0, 0], sizes = [1, 128], strides = [1, 1]} : vector<4x128xf32> to vector<1x128xf32>
      %95 = vector.extract_strided_slice %79 {offsets = [1, 0], sizes = [1, 128], strides = [1, 1]} : vector<4x128xf32> to vector<1x128xf32>
      %96 = vector.extract_strided_slice %79 {offsets = [2, 0], sizes = [1, 128], strides = [1, 1]} : vector<4x128xf32> to vector<1x128xf32>
      %97 = vector.extract_strided_slice %79 {offsets = [3, 0], sizes = [1, 128], strides = [1, 1]} : vector<4x128xf32> to vector<1x128xf32>
      %98 = vector.extract_strided_slice %80 {offsets = [0, 0], sizes = [1, 128], strides = [1, 1]} : vector<4x128xf32> to vector<1x128xf32>
      %99 = vector.extract_strided_slice %80 {offsets = [1, 0], sizes = [1, 128], strides = [1, 1]} : vector<4x128xf32> to vector<1x128xf32>
      %100 = vector.extract_strided_slice %80 {offsets = [2, 0], sizes = [1, 128], strides = [1, 1]} : vector<4x128xf32> to vector<1x128xf32>
      %101 = vector.extract_strided_slice %80 {offsets = [3, 0], sizes = [1, 128], strides = [1, 1]} : vector<4x128xf32> to vector<1x128xf32>
      %cst_34 = arith.constant 5.000000e-01 : f32
      %102 = vector.broadcast %cst_34 : f32 to vector<1x128xf32>
      %103 = arith.mulf %96, %102 : vector<1x128xf32>
      %104 = arith.subf %94, %103 : vector<1x128xf32>
      %cst_35 = arith.constant 5.000000e-01 : f32
      %105 = vector.broadcast %cst_35 : f32 to vector<1x128xf32>
      %106 = arith.mulf %96, %105 : vector<1x128xf32>
      %107 = arith.addf %94, %106 : vector<1x128xf32>
      %cst_36 = arith.constant 5.000000e-01 : f32
      %108 = vector.broadcast %cst_36 : f32 to vector<1x128xf32>
      %109 = arith.mulf %97, %108 : vector<1x128xf32>
      %110 = arith.subf %95, %109 : vector<1x128xf32>
      %cst_37 = arith.constant 5.000000e-01 : f32
      %111 = vector.broadcast %cst_37 : f32 to vector<1x128xf32>
      %112 = arith.mulf %97, %111 : vector<1x128xf32>
      %113 = arith.addf %95, %112 : vector<1x128xf32>
      %cst_38 = arith.constant 5.000000e-01 : f32
      %114 = vector.broadcast %cst_38 : f32 to vector<1x128xf32>
      %115 = arith.mulf %100, %114 : vector<1x128xf32>
      %116 = arith.subf %98, %115 : vector<1x128xf32>
      %cst_39 = arith.constant 5.000000e-01 : f32
      %117 = vector.broadcast %cst_39 : f32 to vector<1x128xf32>
      %118 = arith.mulf %100, %117 : vector<1x128xf32>
      %119 = arith.addf %98, %118 : vector<1x128xf32>
      %cst_40 = arith.constant 5.000000e-01 : f32
      %120 = vector.broadcast %cst_40 : f32 to vector<1x128xf32>
      %121 = arith.mulf %101, %120 : vector<1x128xf32>
      %122 = arith.subf %99, %121 : vector<1x128xf32>
      %cst_41 = arith.constant 5.000000e-01 : f32
      %123 = vector.broadcast %cst_41 : f32 to vector<1x128xf32>
      %124 = arith.mulf %101, %123 : vector<1x128xf32>
      %125 = arith.addf %99, %124 : vector<1x128xf32>
      %126 = arith.minimumf %107, %119 : vector<1x128xf32>
      %127 = arith.maximumf %104, %116 : vector<1x128xf32>
      %128 = arith.subf %126, %127 : vector<1x128xf32>
      %cst_42 = arith.constant 0.000000e+00 : f32
      %129 = vector.broadcast %cst_42 : f32 to vector<1x128xf32>
      %130 = arith.maximumf %128, %129 : vector<1x128xf32>
      %131 = arith.minimumf %113, %125 : vector<1x128xf32>
      %132 = arith.maximumf %110, %122 : vector<1x128xf32>
      %133 = arith.subf %131, %132 : vector<1x128xf32>
      %cst_43 = arith.constant 0.000000e+00 : f32
      %134 = vector.broadcast %cst_43 : f32 to vector<1x128xf32>
      %135 = arith.maximumf %133, %134 : vector<1x128xf32>
      %136 = arith.mulf %130, %135 : vector<1x128xf32>
      %137 = arith.mulf %96, %97 : vector<1x128xf32>
      %138 = arith.mulf %100, %101 : vector<1x128xf32>
      %139 = arith.addf %137, %138 : vector<1x128xf32>
      %140 = arith.subf %139, %136 : vector<1x128xf32>
      %cst_44 = arith.constant 1.000000e-07 : f32
      %141 = vector.broadcast %cst_44 : f32 to vector<1x128xf32>
      %142 = arith.addf %140, %141 : vector<1x128xf32>
      %143 = arith.divf %136, %142 : vector<1x128xf32>
      %144 = arith.maximumf %107, %119 : vector<1x128xf32>
      %145 = arith.minimumf %104, %116 : vector<1x128xf32>
      %146 = arith.subf %144, %145 : vector<1x128xf32>
      %147 = arith.maximumf %113, %125 : vector<1x128xf32>
      %148 = arith.minimumf %110, %122 : vector<1x128xf32>
      %149 = arith.subf %147, %148 : vector<1x128xf32>
      %150 = arith.mulf %146, %149 : vector<1x128xf32>
      %cst_45 = arith.constant 1.000000e-07 : f32
      %151 = vector.broadcast %cst_45 : f32 to vector<1x128xf32>
      %152 = arith.addf %150, %151 : vector<1x128xf32>
      %153 = arith.subf %152, %142 : vector<1x128xf32>
      %154 = arith.divf %153, %152 : vector<1x128xf32>
      %155 = arith.subf %143, %154 : vector<1x128xf32>
      %cst_46 = arith.constant 1.000000e+00 : f32
      %156 = vector.broadcast %cst_46 : f32 to vector<1x128xf32>
      %157 = arith.subf %156, %155 : vector<1x128xf32>
      %158 = arith.mulf %157, %69 : vector<1x128xf32>
      %159 = vector.shape_cast %158 : vector<1x128xf32> to vector<1x1x128xf32>
      %cst_47 = arith.constant dense<0.000000e+00> : vector<1xf32>
      %160 = vector.multi_reduction <add>, %159, %cst_47 [1, 2] : vector<1x1x128xf32> to vector<1xf32>
      %161 = vector.shape_cast %160 : vector<1xf32> to vector<1x1x1xf32>
      %162 = vector.extract %161[0, 0, 0] : f32 from vector<1x1x1xf32>
      %163 = arith.mulf %162, %37 : f32
      %164 = tpu.iota {dimensions = array<i32: 0>} : vector<8x128xi32>
      %165 = tpu.iota {dimensions = array<i32: 1>} : vector<8x128xi32>
      %cst_48 = arith.constant 0.000000e+00 : f32
      %166 = vector.broadcast %cst_48 : f32 to vector<8x128xf32>
      %c0_i32_49 = arith.constant 0 : i32
      %167 = vector.broadcast %c0_i32_49 : i32 to vector<8x128xi32>
      %168 = arith.cmpi eq, %164, %167 : vector<8x128xi32>
      %c0_i32_50 = arith.constant 0 : i32
      %169 = vector.broadcast %c0_i32_50 : i32 to vector<8x128xi32>
      %170 = arith.cmpi eq, %165, %169 : vector<8x128xi32>
      %171 = arith.andi %168, %170 : vector<8x128xi1>
      %172 = vector.broadcast %77 : f32 to vector<8x128xf32>
      %173 = arith.select %171, %172, %166 : vector<8x128xi1>, vector<8x128xf32>
      %c0_i32_51 = arith.constant 0 : i32
      %174 = vector.broadcast %c0_i32_51 : i32 to vector<8x128xi32>
      %175 = arith.cmpi eq, %164, %174 : vector<8x128xi32>
      %c1_i32 = arith.constant 1 : i32
      %176 = vector.broadcast %c1_i32 : i32 to vector<8x128xi32>
      %177 = arith.cmpi eq, %165, %176 : vector<8x128xi32>
      %178 = arith.andi %175, %177 : vector<8x128xi1>
      %179 = vector.broadcast %93 : f32 to vector<8x128xf32>
      %180 = arith.select %178, %179, %173 : vector<8x128xi1>, vector<8x128xf32>
      %c0_i32_52 = arith.constant 0 : i32
      %181 = vector.broadcast %c0_i32_52 : i32 to vector<8x128xi32>
      %182 = arith.cmpi eq, %164, %181 : vector<8x128xi32>
      %c2_i32 = arith.constant 2 : i32
      %183 = vector.broadcast %c2_i32 : i32 to vector<8x128xi32>
      %184 = arith.cmpi eq, %165, %183 : vector<8x128xi32>
      %185 = arith.andi %182, %184 : vector<8x128xi1>
      %186 = vector.broadcast %163 : f32 to vector<8x128xf32>
      %187 = arith.select %185, %186, %180 : vector<8x128xi1>, vector<8x128xf32>
      %c0_53 = arith.constant 0 : index
      %c0_54 = arith.constant 0 : index
      %c0_55 = arith.constant 0 : index
      %c0_56 = arith.constant 0 : index
      %188 = vector.load %arg7[%c0_53, %c0_54, %c0_55, %c0_56] : memref<1x1x8x128xf32, #tpu.memory_space<vmem>>, vector<1x1x8x128xf32>
      %189 = vector.shape_cast %188 : vector<1x1x8x128xf32> to vector<8x128xf32>
      %190 = vector.shape_cast %187 : vector<8x128xf32> to vector<1x1x8x128xf32>
      tpu.vector_store %arg7[%c0_53, %c0_54, %c0_55, %c0_56], %190 {strides = array<i32>} : memref<1x1x8x128xf32, #tpu.memory_space<vmem>>, vector<1x1x8x128xf32>,
    } else {
    }
    return
  }
  func.func @transform_0(%arg0: i32, %arg1: i32, %arg2: i32) -> (i32, i32, i32) {
    %c1_i32 = arith.constant 1 : i32
    %0 = arith.muli %arg0, %c1_i32 : i32
    %1 = arith.addi %0, %arg2 : i32
    %c0_i32 = arith.constant 0 : i32
    %c0_i32_0 = arith.constant 0 : i32
    return %arg1, %1, %c0_i32 : i32, i32, i32
  }
  func.func @transform_1(%arg0: i32, %arg1: i32, %arg2: i32) -> (i32, i32, i32) {
    %c0_i32 = arith.constant 0 : i32
    %c0_i32_0 = arith.constant 0 : i32
    %c0_i32_1 = arith.constant 0 : i32
    return %arg1, %c0_i32, %c0_i32_0 : i32, i32, i32
  }
  func.func @transform_2(%arg0: i32, %arg1: i32, %arg2: i32) -> (i32, i32, i32) {
    %c0_i32 = arith.constant 0 : i32
    %c0_i32_0 = arith.constant 0 : i32
    %c0_i32_1 = arith.constant 0 : i32
    return %arg1, %c0_i32, %c0_i32_0 : i32, i32, i32
  }
  func.func @transform_3(%arg0: i32, %arg1: i32, %arg2: i32) -> (i32, i32) {
    %c0_i32 = arith.constant 0 : i32
    %c0_i32_0 = arith.constant 0 : i32
    %c0_i32_1 = arith.constant 0 : i32
    return %c0_i32, %c0_i32_0 : i32, i32
  }
  func.func @transform_4(%arg0: i32, %arg1: i32, %arg2: i32) -> (i32, i32, i32, i32) {
    %c0_i32 = arith.constant 0 : i32
    %c0_i32_0 = arith.constant 0 : i32
    %c0_i32_1 = arith.constant 0 : i32
    return %arg0, %arg1, %c0_i32, %c0_i32_0 : i32, i32, i32, i32
  }
}

</mosaic_0001>

<llo_original>
// kernel: tpu_custom_call.1
$region0: #{tpu_custom_call.1}
  #allocation0 [shape = 'u32[]', space=smem, size = 0x4, offset = 0x4, fixed_abs, tag = 'smem constant byte address 0x4 - core index']
  #allocation1 [shape = 'u32[144,128]{1,0:T(1,128)}', space=vmem, size = 0x12000, scoped, tag = 'internal scratch']
  #allocation2 [shape = 'f32[8,128]{1,0:T(8,128)}', space=vmem, size = 0x1000, scoped, tag = 'scratch operand']
  %s0 = inlined_call_operand.hbm [shape: f32[3,16,128], index: 0, kind: input, shape index: {}]
  %s1 = inlined_call_operand.vmem [shape: f32[3,1,128], index: 1, kind: input, shape index: {}]
  %s2 = inlined_call_operand.hbm [shape: f32[3,4,128], index: 2, kind: input, shape index: {}]
  %s3 = inlined_call_operand.vmem [shape: f32[4,128], index: 3, kind: input, shape index: {}]
  %s4 = inlined_call_operand.hbm [shape: f32[2,3,8,128], index: 4, kind: output, shape index: {}]
  %s5 = sld [smem:[#allocation0]]
  $region65: #{tpu_custom_call.1} parent=0
    _
  %s7 = ssub.s32 1, %s5
  %s8 = scalar_select 0, %s7, %s5
  $region1: #{tpu_custom_call.1} parent=0
    #allocation3 [shape = 'u8[8192]{0}', space=vmem, size = 0x2000, scoped, tag = 'input window, operand 0']
    #allocation4 [shape = 's32[2]{0}', space=sflag, size = 0x8, scoped, tag = 'scoped memory for tpu_custom_call.1']
    #allocation5 [shape = 's32[2]{0}', space=sflag, size = 0x8, scoped, tag = 'scoped memory for tpu_custom_call.1']
    #allocation6 [shape = 'u8[4096]{0}', space=vmem, size = 0x1000, scoped, tag = 'input window, operand 2']
    #allocation7 [shape = 's32[2]{0}', space=sflag, size = 0x8, scoped, tag = 'scoped memory for tpu_custom_call.1']
    #allocation8 [shape = 'u8[8192]{0}', space=vmem, size = 0x2000, scoped, tag = 'output window, operand 0']
    %9 = vsyncpa [#allocation4], 0
    %s10 = scalar_lea.sflag [#allocation4], 1
    %11 = vsyncpa %s10, 0
    %12 = vsyncpa [#allocation7], 0
    %s13 = scalar_lea.sflag [#allocation7], 1
    %14 = vsyncpa %s13, 0
    %15 = vsyncpa [#allocation5], 0
    %s16 = scalar_lea.sflag [#allocation5], 1
    %17 = vsyncpa %s16, 0
    loop: start=0, step=1, limit=8
    $region2: #{tpu_custom_call.1} parent=1 // loop_pre_header
      _
    $region3: #{tpu_custom_call.1} parent=1 // loop_header
      %s19 = sphi 0, %s23
      %p20 = scmp.ge.s32.totalorder %s19, 8
      %s26 = sphi 0, %s45
      %s27 = sphi 0, %s41
      %s28 = sphi 0, %s37
      %s29 = sphi 0, %s26
      %s30 = sphi 0, %s27
      %s31 = sphi 0, %s28
      %s32 = sphi 0, %s29
      %s33 = sphi 0, %s30
      %s34 = sphi 0, %s31
      %s52 = sphi 0, %s54
      %s55 = sphi 0, %s52
      %s56 = sphi 0, %s55
      %s72 = sphi 0, %s56
      %s78 = sphi 0, %s80
      %s81 = sphi 0, %s78
      %s82 = sphi 0, %s81
      %s98 = sphi 0, %s82
      %s104 = sphi 0, %s106
      %s107 = sphi 0, %s104
      %s108 = sphi 0, %s107
      %s124 = sphi 0, %s108
      %s128 = sphi 0, %s128
      %s130 = sphi 0, %s128
      %s131 = sphi 0, %s130
      %s145 = sphi 0, %s131
      %s153 = sphi 0, %s155
      %s156 = sphi 0, %s153
      %s157 = sphi 0, %s156
      %s173 = sphi 0, %s157
    $region4: #{tpu_custom_call.1} parent=1 // loop_header_branch
      %22 = sbr.rel (%p20) target = $region8
    $region5: #{tpu_custom_call.1} parent=1 // loop_body
      %s24 = ssub.s32 %s19, 1
      %s25 = ssub.s32 %s19, 2
      %s35 = sadd.s32 1, %s28
      %p36 = scmp.ge.s32.totalorder %s35, 1
      %s37 = scalar_select %p36, 0, %s35
      %s38 = sadd.s32 1, %s27
      %s39 = scalar_select %p36, %s38, %s27
      %p40 = scmp.ge.s32.totalorder %s39, 3
      %s41 = scalar_select %p40, 0, %s39
      %s42 = sadd.s32 1, %s26
      %s43 = scalar_select %p40, %s42, %s26
      %p44 = scmp.ge.s32.totalorder %s43, 2
      %s45 = scalar_select %p44, 0, %s43
      %s46 = sadd.s32 %s26, %s28
      %s47 = sadd.s32 %s45, %s37
      %s48 = ssub.s32 %s27, %s41
      %s49 = ssub.s32 %s46, %s47
      %s50 = sor.u32 %s48, %s49
      %p51 = scmp.eq.s32.totalorder %s50, 0
      %s53 = sadd.s32 %s52, 1
      %s54 = scalar_select %p51, %s52, %s53
      %p57 = pneg %p51
      %p58 = scmp.eq.s32.totalorder %s19, 5
      %p59 = por %p57, %p58
      %p60 = scmp.ne.s32.totalorder %s52, %s55
      %p61 = scmp.eq.s32.totalorder %s19, 0
      %p62 = por %p60, %p61
      %p63 = scmp.ne.s32.totalorder %s52, %s55
      %p64 = scmp.eq.s32.totalorder %s24, 5
      %p65 = por %p63, %p64
      %p66 = scmp.ne.s32.totalorder %s55, %s56
      %p67 = scmp.eq.s32.totalorder %s24, 0
      %p68 = por %p66, %p67
      %p69 = scmp.ne.s32.totalorder %s55, %s56
      %p70 = scmp.eq.s32.totalorder %s25, 5
      %p71 = por %p69, %p70
      %p73 = scmp.ne.s32.totalorder %s56, %s72
      %p74 = scmp.eq.s32.totalorder %s25, 0
      %p75 = por %p73, %p74
      %s76 = ssub.s32 %s27, %s41
      %p77 = scmp.eq.s32.totalorder %s76, 0
      %s79 = sadd.s32 %s78, 1
      %s80 = scalar_select %p77, %s78, %s79
      %p83 = pneg %p77
      %p84 = scmp.eq.s32.totalorder %s19, 5
      %p85 = por %p83, %p84
      %p86 = scmp.ne.s32.totalorder %s78, %s81
      %p87 = scmp.eq.s32.totalorder %s19, 0
      %p88 = por %p86, %p87
      %p89 = scmp.ne.s32.totalorder %s78, %s81
      %p90 = scmp.eq.s32.totalorder %s24, 5
      %p91 = por %p89, %p90
      %p92 = scmp.ne.s32.totalorder %s81, %s82
      %p93 = scmp.eq.s32.totalorder %s24, 0
      %p94 = por %p92, %p93
      %p95 = scmp.ne.s32.totalorder %s81, %s82
      %p96 = scmp.eq.s32.totalorder %s25, 5
      %p97 = por %p95, %p96
      %p99 = scmp.ne.s32.totalorder %s82, %s98
      %p100 = scmp.eq.s32.totalorder %s25, 0
      %p101 = por %p99, %p100
      %s102 = ssub.s32 %s27, %s41
      %p103 = scmp.eq.s32.totalorder %s102, 0
      %s105 = sadd.s32 %s104, 1
      %s106 = scalar_select %p103, %s104, %s105
      %p109 = pneg %p103
      %p110 = scmp.eq.s32.totalorder %s19, 5
      %p111 = por %p109, %p110
      %p112 = scmp.ne.s32.totalorder %s104, %s107
      %p113 = scmp.eq.s32.totalorder %s19, 0
      %p114 = por %p112, %p113
      %p115 = scmp.ne.s32.totalorder %s104, %s107
      %p116 = scmp.eq.s32.totalorder %s24, 5
      %p117 = por %p115, %p116
      %p118 = scmp.ne.s32.totalorder %s107, %s108
      %p119 = scmp.eq.s32.totalorder %s24, 0
      %p120 = por %p118, %p119
      %p121 = scmp.ne.s32.totalorder %s107, %s108
      %p122 = scmp.eq.s32.totalorder %s25, 5
      %p123 = por %p121, %p122
      %p125 = scmp.ne.s32.totalorder %s108, %s124
      %p126 = scmp.eq.s32.totalorder %s25, 0
      %p127 = por %p125, %p126
      %s129 = sadd.s32 %s128, 1
      %p132 = scmp.eq.s32.totalorder %s19, 5
      %p133 = scmp.ne.s32.totalorder %s128, %s130
      %p134 = scmp.eq.s32.totalorder %s19, 0
      %p135 = por %p133, %p134
      %p136 = scmp.ne.s32.totalorder %s128, %s130
      %p137 = scmp.eq.s32.totalorder %s24, 5
      %p138 = por %p136, %p137
      %p139 = scmp.ne.s32.totalorder %s130, %s131
      %p140 = scmp.eq.s32.totalorder %s24, 0
      %p141 = por %p139, %p140
      %p142 = scmp.ne.s32.totalorder %s130, %s131
      %p143 = scmp.eq.s32.totalorder %s25, 5
      %p144 = por %p142, %p143
      %p146 = scmp.ne.s32.totalorder %s131, %s145
      %p147 = scmp.eq.s32.totalorder %s25, 0
      %p148 = por %p146, %p147
      %s149 = ssub.s32 %s26, %s45
      %s150 = ssub.s32 %s27, %s41
      %s151 = sor.u32 %s149, %s150
      %p152 = scmp.eq.s32.totalorder %s151, 0
      %s154 = sadd.s32 %s153, 1
      %s155 = scalar_select %p152, %s153, %s154
      %p158 = pneg %p152
      %p159 = scmp.eq.s32.totalorder %s19, 5
      %p160 = por %p158, %p159
      %p161 = scmp.ne.s32.totalorder %s153, %s156
      %p162 = scmp.eq.s32.totalorder %s19, 0
      %p163 = por %p161, %p162
      %p164 = scmp.ne.s32.totalorder %s153, %s156
      %p165 = scmp.eq.s32.totalorder %s24, 5
      %p166 = por %p164, %p165
      %p167 = scmp.ne.s32.totalorder %s156, %s157
      %p168 = scmp.eq.s32.totalorder %s24, 0
      %p169 = por %p167, %p168
      %p170 = scmp.ne.s32.totalorder %s156, %s157
      %p171 = scmp.eq.s32.totalorder %s25, 5
      %p172 = por %p170, %p171
      %p174 = scmp.ne.s32.totalorder %s157, %s173
      %p175 = scmp.eq.s32.totalorder %s25, 0
      %p176 = por %p174, %p175
      %p177 = scmp.le.s32.totalorder 1, %s19
      %p178 = scmp.lt.s32.totalorder %s19, 7
      %p179 = pnand %p177, %p178
      %p180 = pneg %p179
      // Predicated region
      $region9: #{tpu_custom_call.1} parent=5 // pred_check
        _
      $region10: #{tpu_custom_call.1} parent=5 // pred_check_branch
        %182 = sbr.rel (%p179) target = $region12
      $region11: #{tpu_custom_call.1} parent=5 // pred_region
        %s183 = ssub.s32 %s19, 1
        // Predicated region
        $region13: #{tpu_custom_call.1} parent=11 // pred_check
          %p184 = pneg %p141
        $region14: #{tpu_custom_call.1} parent=11 // pred_check_branch
          %186 = sbr.rel (%p184) target = $region16
        $region15: #{tpu_custom_call.1} parent=11 // pred_region
          _
        $region16: #{tpu_custom_call.1} parent=11 // pred_fallthru
          _
      $region12: #{tpu_custom_call.1} parent=5 // pred_fallthru
        _
      %p187 = scmp.lt.s32.totalorder %s19, 6
      // Predicated region
      $region17: #{tpu_custom_call.1} parent=5 // pred_check
        %p188 = pneg %p187
      $region18: #{tpu_custom_call.1} parent=5 // pred_check_branch
        %190 = sbr.rel (%p188) target = $region20
      $region19: #{tpu_custom_call.1} parent=5 // pred_region
        // Predicated region
        $region21: #{tpu_custom_call.1} parent=19 // pred_check
          %p191 = pneg %p62
        $region22: #{tpu_custom_call.1} parent=19 // pred_check_branch
          %193 = sbr.rel (%p191) target = $region24
        $region23: #{tpu_custom_call.1} parent=19 // pred_region
          %s194 = sand.u32 %s52, 1
          %s195 = scalar_lea.sflag [#allocation4], %s194
          %s196 = sand.u32 %s52, 1
          %s197 = smul.addr %s196, 8
          %s198 = scalar_lea.vmem [#allocation3], %s197
          %s199 = sadd.s32 %s26, %s28
          %s201 = ssub.s32 128, 128
          %202 = vsyncadd %s195, %s201
          %s203 = smul.addr %s27, 2
          %s204 = sadd.s32 %s199, %s203
          %s205 = smul.addr %s204, 128
          %s206 = scalar_lea.hbm %s0, %s205
          %s208 = sshll.u32 %s198, 4
          %s209 = int_to_ptr.vmem [resolvable:$true] %s208
          %211 = dma.hbm_to_vmem [thread:$0]  %s206, 128, %s209, %s195
        $region24: #{tpu_custom_call.1} parent=19 // pred_fallthru
          _
        // Predicated region
        $region25: #{tpu_custom_call.1} parent=19 // pred_check
          %p212 = pneg %p88
        $region26: #{tpu_custom_call.1} parent=19 // pred_check_branch
          %214 = sbr.rel (%p212) target = $region28
        $region27: #{tpu_custom_call.1} parent=19 // pred_region
          %p215 = scmp.lt.s32.totalorder %s27, 2
          %s216 = scalar_select %p215, %s27, 2
          %s217 = scalar_lea.vmem %s1, %s216
        $region28: #{tpu_custom_call.1} parent=19 // pred_fallthru
          _
        // Predicated region
        $region29: #{tpu_custom_call.1} parent=19 // pred_check
          %p218 = pneg %p114
        $region30: #{tpu_custom_call.1} parent=19 // pred_check_branch
          %220 = sbr.rel (%p218) target = $region32
        $region31: #{tpu_custom_call.1} parent=19 // pred_region
          %s221 = sand.u32 %s104, 1
          %s222 = scalar_lea.sflag [#allocation7], %s221
          %s223 = sand.u32 %s104, 1
          %s224 = smul.addr %s223, 4
          %s225 = scalar_lea.vmem [#allocation6], %s224
          %s227 = ssub.s32 64, 64
          %228 = vsyncadd %s222, %s227
          %s229 = smul.addr %s27, 64
          %s230 = scalar_lea.hbm %s2, %s229
          %s232 = sshll.u32 %s225, 4
          %s233 = int_to_ptr.vmem [resolvable:$true] %s232
          %235 = dma.hbm_to_vmem [thread:$0]  %s230, 64, %s233, %s222
        $region32: #{tpu_custom_call.1} parent=19 // pred_fallthru
          _
      $region20: #{tpu_custom_call.1} parent=5 // pred_fallthru
        _
      %p236 = scmp.le.s32.totalorder 1, %s19
      %p237 = scmp.lt.s32.totalorder %s19, 7
      %p238 = pnand %p236, %p237
      %p239 = pneg %p238
      // Predicated region
      $region33: #{tpu_custom_call.1} parent=5 // pred_check
        _
      $region34: #{tpu_custom_call.1} parent=5 // pred_check_branch
        %241 = sbr.rel (%p238) target = $region36
      $region35: #{tpu_custom_call.1} parent=5 // pred_region
        %s242 = ssub.s32 %s19, 1
        %s243 = sand.u32 %s55, 1
        %s244 = scalar_lea.sflag [#allocation4], %s243
        %s245 = sand.u32 %s55, 1
        %s246 = smul.addr %s245, 8
        %s247 = scalar_lea.vmem [#allocation3], %s246
        // Predicated region
        $region37: #{tpu_custom_call.1} parent=35 // pred_check
          %p248 = pneg %p68
        $region38: #{tpu_custom_call.1} parent=35 // pred_check_branch
          %250 = sbr.rel (%p248) target = $region40
        $region39: #{tpu_custom_call.1} parent=35 // pred_region
          %251 = dma.done %s244, 128
        $region40: #{tpu_custom_call.1} parent=35 // pred_fallthru
          _
        %s252 = sand.u32 %s107, 1
        %s253 = scalar_lea.sflag [#allocation7], %s252
        %s254 = sand.u32 %s107, 1
        %s255 = smul.addr %s254, 4
        %s256 = scalar_lea.vmem [#allocation6], %s255
        // Predicated region
        $region41: #{tpu_custom_call.1} parent=35 // pred_check
          %p257 = pneg %p120
        $region42: #{tpu_custom_call.1} parent=35 // pred_check_branch
          %259 = sbr.rel (%p257) target = $region44
        $region43: #{tpu_custom_call.1} parent=35 // pred_region
          %260 = dma.done %s253, 64
        $region44: #{tpu_custom_call.1} parent=35 // pred_fallthru
          _
        %s261 = sand.u32 %s55, 1
        %s262 = scalar_lea.sflag [#allocation4], %s261
        %s263 = sand.u32 %s55, 1
        %s264 = smul.addr %s263, 8
        %s265 = scalar_lea.vmem [#allocation3], %s264
        %p266 = pneg %p68
        %p267 = pneg %p65
        %p268 = scmp.lt.s32.totalorder %s30, 2
        %s269 = scalar_select %p268, %s30, 2
        %s270 = scalar_lea.vmem %s1, %s269
        %p271 = pneg %p94
        %p272 = pneg %p91
        %s273 = sand.u32 %s107, 1
        %s274 = scalar_lea.sflag [#allocation7], %s273
        %s275 = sand.u32 %s107, 1
        %s276 = smul.addr %s275, 4
        %s277 = scalar_lea.vmem [#allocation6], %s276
        %p278 = pneg %p120
        %p279 = pneg %p117
        %p280 = pneg %p141
        %p281 = pneg %p138
        %p282 = pneg %p169
        %p283 = pneg %p166
        %s284 = sand.u32 %s156, 1
        %s285 = scalar_lea.sflag [#allocation5], %s284
        %s286 = sand.u32 %s156, 1
        %s287 = smul.addr %s286, 8
        %s288 = scalar_lea.vmem [#allocation8], %s287
        %s289 = sadd.s32 %s29, %s31
        %p290 = scmp.lt.s32.totalorder %s30, 2
        %s291 = scalar_select %p290, %s30, 2
        %s292 = scalar_lea.vmem %s1, %s291
        %p293 = scmp.eq.s32.totalorder %s31, 0
        // Predicated region
        $region45: #{tpu_custom_call.1} parent=35 // pred_check
          %p294 = pneg %p293
        $region46: #{tpu_custom_call.1} parent=35 // pred_check_branch
          %296 = sbr.rel (%p294) target = $region48
        $region47: #{tpu_custom_call.1} parent=35 // pred_region
          %297 = vst [vmem:[#allocation2] sm:$0xff] 0.0
        $region48: #{tpu_custom_call.1} parent=35 // pred_fallthru
          _
        %v298 = vld [vmem:[%s247] sm:$0xff]
        %v299 = vxor.u32 %v298, 2147483648
        %v300 = vmul.f32 %v299, 1.442695
        %v301 = vpow.pop %v300
        %v302 = vadd.f32 %v301, 1.0
        %v303 = vrcp.pop %v302
        %v304 = vmul.f32 1.0, %v303
        %v305 = vmax.f32 %v298, 0.0
        %v306 = vsub.f32 1.0, %v304
        %v307 = vmax.f32 %v304, %v306
        %v308 = vlog2.pop %v307
        %v309 = vmul.f32 %v308, 0.6931472
        %v310 = vsub.f32 %v305, %v309
        %v311 = vrsqrt.pop %v304
        %v312 = vmul.f32 %v304, %v311
        %vm313 = vcmp.eq.f32.partialorder %v304, inf
        %v314 = vsel %vm313, %v304, %v312
        %vm315 = vcmp.eq.f32.partialorder %v304, 0.0
        %v316 = vand.u32 %v304, 2147483648
        %v317 = vsel %vm315, %v316, %v314
        %v318 = vmul.f32 %v304, %v317
        %v319 = vmul.f32 %v310, %v318
        %v320 = vmul.f32 %v319, 0.75
        %v321 = vld [vmem:[#allocation2] sm:$0xff]
        %v322 = vadd.f32 %v320, 0.0
        %v323 = vadd.f32 %v321, %v322
        %324 = vst [vmem:[#allocation2] sm:$0xff] %v323
        // Predicated region
        $region49: #{tpu_custom_call.1} parent=35 // pred_check
          %p325 = pneg %p293
        $region50: #{tpu_custom_call.1} parent=35 // pred_check_branch
          %327 = sbr.rel (%p325) target = $region52
        $region51: #{tpu_custom_call.1} parent=35 // pred_region
          %v328 = vld [vmem:[#allocation2] sm:$0xff]
          %329 = vadd.xlane.f32.xlu0 %v328
          %v330 = vpop.xlane.xlu0 %329
          %v331 = vrot.slane %v330, 4
          %v332 = vadd.f32 %v330, %v331
          %v333 = vrot.slane %v332, 2
          %v334 = vadd.f32 %v332, %v333
          %v335 = vrot.slane %v334, 1
          %v336 = vadd.f32 %v334, %v335
          %s337 = vtos %v336
          %p338 = scmp.eq.s32.totalorder %s29, 0
          %s339 = scalar_select %p338, 1, 0
          %s340 = scvt.s32.f32 %s339
          %v341 = vld [vmem:[%s292] sm:$0x1]
          %v342 = vxor.u32 %v341, 2147483648
          %v343 = vmul.f32 %v342, 1.442695
          %v344 = vpow.pop %v343
          %v345 = vadd.f32 %v344, 1.0
          %v346 = vrcp.pop %v345
          %v347 = vmul.f32 1.0, %v346
          %v348 = vsub.f32 1.0, %v347
          %v349 = vmax.f32 %v347, %v348
          %v350 = vlog2.pop %v349
          %v351 = vmul.f32 %v350, 0.6931472
          %v352 = vmax.f32 %v341, 0.0
          %v353 = vsub.f32 %v352, %v351
          %v354 = vsub.f32 %v353, %v341
          %v355 = vrsqrt.pop %v348
          %v356 = vmul.f32 %v348, %v355
          %vm357 = vcmp.eq.f32.partialorder %v348, inf
          %v358 = vsel %vm357, %v348, %v356
          %vm359 = vcmp.eq.f32.partialorder %v348, 0.0
          %v360 = vand.u32 %v348, 2147483648
          %v361 = vsel %vm359, %v360, %v358
          %v362 = vmul.f32 %v348, %v361
          %v363 = vmul.f32 %v354, %v362
          %v364 = vmul.f32 %v363, 0.25
          %v365 = vrsqrt.pop %v347
          %v366 = vmul.f32 %v347, %v365
          %vm367 = vcmp.eq.f32.partialorder %v347, inf
          %v368 = vsel %vm367, %v347, %v366
          %vm369 = vcmp.eq.f32.partialorder %v347, 0.0
          %v370 = vand.u32 %v347, 2147483648
          %v371 = vsel %vm369, %v370, %v368
          %v372 = vmul.f32 %v347, %v371
          %v373 = vmul.f32 %v353, %v372
          %v374 = vmul.f32 %v373, 0.75
          %v375 = vlaneseq
          %v376 = vand.u32 %v375, 127
          %vm377 = vcmp.lt.s32.totalorder %v376, 5
          %v378 = vsel %vm377, 1, 0
          %v379 = vcvt.s32.f32 %v378
          %v380 = vsub.f32 %v364, %v374
          %v381 = vmul.f32 %v380, %v379
          %vm382 = vcmask 1040384
          %v383 = vsel %vm382, %v381, 0.0
          %384 = vadd.xlane.f32.xlu0 %v383
          %v385 = vpop.xlane.xlu0 %384
          %v386 = vrot.slane %v385, 4
          %v387 = vadd.f32 %v385, %v386
          %v388 = vrot.slane %v387, 2
          %v389 = vadd.f32 %v387, %v388
          %v390 = vrot.slane %v389, 1
          %v391 = vadd.f32 %v389, %v390
          %s392 = vtos %v391
          %s393 = smul.f32 %s392, %s340
          %s394 = sadd.f32 %s337, %s393
          %v395 = vld [vmem:[%s256] sm:$0xf]
          %v396 = vld [vmem:[%s3] sm:$0xf]
          %v397 = vsub.f32 %v395, %v396
          %v398 = vand.u32 2147483647, %v397
          %v399 = vmul.f32 %v398, %v379
          %vm400 = vcmask 1043456
          %v401 = vsel %vm400, %v399, 0.0
          %402 = vadd.xlane.f32.xlu0 %v401
          %v403 = vpop.xlane.xlu0 %402
          %v404 = vrot.slane %v403, 4
          %v405 = vadd.f32 %v403, %v404
          %v406 = vrot.slane %v405, 2
          %v407 = vadd.f32 %v405, %v406
          %v408 = vrot.slane %v407, 1
          %v409 = vadd.f32 %v407, %v408
          %s410 = vtos %v409
          %s411 = smul.f32 %s410, %s340
          %v412 = vmul.f32 %v395, 0.5
          %v414 = vrot.slane %v412, 2
          %v416 = vsub.f32 %v395, %v414
          %v417 = vadd.f32 %v395, %v414
          %v418 = vmul.f32 %v396, 0.5
          %v420 = vrot.slane %v418, 2
          %v422 = vsub.f32 %v396, %v420
          %v423 = vadd.f32 %v396, %v420
          %v424 = vmin.f32 %v417, %v423
          %v425 = vmax.f32 %v416, %v422
          %v426 = vsub.f32 %v424, %v425
          %v427 = vmax.f32 %v426, 0.0
          %v429 = vrot.slane %v427, 1
          %v431 = vmul.f32 %v427, %v429
          %v433 = vrot.slane %v395, 1
          %v435 = vmul.f32 %v395, %v433
          %v437 = vrot.slane %v396, 1
          %v439 = vmul.f32 %v396, %v437
          %v440 = vadd.f32 %v435, %v439
          %v442 = vrot.slane %v431, 6
          %v444 = vsub.f32 %v440, %v442
          %v445 = vadd.f32 %v444, 1e-07
          %v447 = vrot.slane %v445, 2
          %v449 = vrcp.pop %v447
          %v450 = vmul.f32 %v431, %v449
          %v451 = vmax.f32 %v417, %v423
          %v452 = vmin.f32 %v416, %v422
          %v453 = vsub.f32 %v451, %v452
          %v455 = vrot.slane %v453, 1
          %v457 = vmul.f32 %v453, %v455
          %v458 = vadd.f32 %v457, 1e-07
          %v459 = vsub.f32 %v458, %v447
          %v460 = vrcp.pop %v458
          %v461 = vmul.f32 %v459, %v460
          %v462 = vsub.f32 %v450, %v461
          %v463 = vsub.f32 1.0, %v462
          %v464 = vmul.f32 %v463, %v379
          %v465 = vsel %vm382, %v464, 0.0
          %466 = vadd.xlane.f32.xlu0 %v465
          %v467 = vpop.xlane.xlu0 %466
          %v468 = vrot.slane %v467, 4
          %v469 = vadd.f32 %v467, %v468
          %v470 = vrot.slane %v469, 2
          %v471 = vadd.f32 %v469, %v470
          %v472 = vrot.slane %v471, 1
          %v473 = vadd.f32 %v471, %v472
          %s474 = vtos %v473
          %s475 = smul.f32 %s474, %s340
          %v476 = vlaneseq
          %v477 = vshrl.u32 %v476, 7
          %vm478 = vcmp.eq.s32.totalorder %v477, 0
          %vm479 = vcmp.eq.s32.totalorder %v376, 0
          %vm480 = vmand %vm478, %vm479
          %v481 = vstv %s394
          %v482 = vsel %vm480, %v481, 0.0
          %vm483 = vcmp.eq.s32.totalorder %v376, 1
          %vm484 = vmand %vm478, %vm483
          %v485 = vstv %s411
          %v486 = vsel %vm484, %v485, %v482
          %vm487 = vcmp.eq.s32.totalorder %v376, 2
          %vm488 = vmand %vm478, %vm487
          %v489 = vstv %s475
          %v490 = vsel %vm488, %v489, %v486
          %491 = vst [vmem:[%s288] sm:$0xff] %v490
        $region52: #{tpu_custom_call.1} parent=35 // pred_fallthru
          _
        %s492 = sand.u32 %s156, 1
        %s493 = scalar_lea.sflag [#allocation5], %s492
        %s494 = sand.u32 %s156, 1
        %s495 = smul.addr %s494, 8
        %s496 = scalar_lea.vmem [#allocation8], %s495
        // Predicated region
        $region53: #{tpu_custom_call.1} parent=35 // pred_check
          %p497 = pneg %p166
        $region54: #{tpu_custom_call.1} parent=35 // pred_check_branch
          %499 = sbr.rel (%p497) target = $region56
        $region55: #{tpu_custom_call.1} parent=35 // pred_region
          %s501 = ssub.s32 128, 128
          %502 = vsyncadd %s493, %s501
          %s503 = smul.addr %s29, 3
          %s504 = sadd.s32 %s30, %s503
          %s505 = smul.addr %s504, 128
          %s506 = scalar_lea.hbm %s4, %s505
          %s508 = sshll.u32 %s496, 4
          %s509 = int_to_ptr.vmem [resolvable:$true] %s508
          %511 = dma.vmem_to_hbm [thread:$0]  %s509, 128, %s506, %s493
        $region56: #{tpu_custom_call.1} parent=35 // pred_fallthru
          _
      $region36: #{tpu_custom_call.1} parent=5 // pred_fallthru
        _
      %p512 = scmp.le.s32.totalorder 2, %s19
      // Predicated region
      $region57: #{tpu_custom_call.1} parent=5 // pred_check
        %p513 = pneg %p512
      $region58: #{tpu_custom_call.1} parent=5 // pred_check_branch
        %515 = sbr.rel (%p513) target = $region60
      $region59: #{tpu_custom_call.1} parent=5 // pred_region
        %s516 = ssub.s32 %s19, 2
        // Predicated region
        $region61: #{tpu_custom_call.1} parent=59 // pred_check
          %p517 = pneg %p172
        $region62: #{tpu_custom_call.1} parent=59 // pred_check_branch
          %519 = sbr.rel (%p517) target = $region64
        $region63: #{tpu_custom_call.1} parent=59 // pred_region
          %s520 = sand.u32 %s157, 1
          %s521 = scalar_lea.sflag [#allocation5], %s520
          %s522 = sand.u32 %s157, 1
          %s523 = smul.addr %s522, 8
          %s524 = scalar_lea.vmem [#allocation8], %s523
          %525 = dma.done %s521, 128
        $region64: #{tpu_custom_call.1} parent=59 // pred_fallthru
          _
      $region60: #{tpu_custom_call.1} parent=5 // pred_fallthru
        _
    $region6: #{tpu_custom_call.1} parent=1 // loop_footer
      %s23 = sadd.s32 1, %s19
    $region7: #{tpu_custom_call.1} parent=1 // loop_footer_branch
      %18 = sbr.rel target = $region3
    $region8: #{tpu_custom_call.1} parent=1 // loop_exit
      _
    %526 = vsyncpa [#allocation4], 1
    %s527 = scalar_lea.sflag [#allocation4], 1
    %528 = vsyncpa %s527, 1
    %529 = vsyncpa [#allocation7], 1
    %s530 = scalar_lea.sflag [#allocation7], 1
    %531 = vsyncpa %s530, 1
    %532 = vsyncpa [#allocation5], 1
    %s533 = scalar_lea.sflag [#allocation5], 1
    %534 = vsyncpa %s533, 1

</llo_original>
